<compile_context>
chip_gen: v7x
topology: tpu7x:2x2x1
jax: 0.10.0
libtpu: 0.0.40
codegen_flags: <defaults>
</compile_context>

<pallas_src>
import functools

import jax
import jax.numpy as jnp
from jax import lax
from jax.experimental import pallas as pl
from jax.experimental.pallas import tpu as pltpu

_LANES = 128
_ACC_SUBLANES = 8                       # f32 accumulator sublane group
_TARGET_BLOCK_BYTES = 2 * 1024 * 1024   # per input per grid step
_SMALL_INPUT_BYTES = 256 * 1024         # below this: single-step, no grid
_VMEM_LIMIT_BYTES = 32 * 1024 * 1024    # <= physical VMEM on v5e/v6e/v7x


def _psnr_small_kernel(x_ref, y_ref, o_ref):
    """Tiny-input path: whole array is a single block, one kernel step."""
    d = x_ref[...].astype(jnp.float32) - y_ref[...].astype(jnp.float32)
    o_ref[...] = jnp.sum(d * d, axis=0, keepdims=True)


def _psnr_partial_kernel(x_ref, y_ref, o_ref, *, rows, block_rows,
                         blocks_per_slice, needs_mask):
    """Accumulate per-slice partial sums of squared differences.

    Grid = (n_slices [parallel], blocks_per_slice [arbitrary]).
    o_ref is one (8, 128) f32 block per slice, resident across the inner axis.
    """
    s = pl.program_id(0)
    b = pl.program_id(1)

    @pl.when(b == 0)
    def _init():
        o_ref[...] = jnp.zeros_like(o_ref)

    d = x_ref[...].astype(jnp.float32) - y_ref[...].astype(jnp.float32)
    sq = d * d

    def _accum(vals):
        # Vreg-aligned sublane-group reduce: (block_rows,128) -> (8,128) with
        # plain full-vreg adds; cross-lane reduce happens once in the wrapper.
        o_ref[...] += vals.reshape(
            block_rows // _ACC_SUBLANES, _ACC_SUBLANES, _LANES).sum(axis=0)

    if not needs_mask:
        _accum(sq)
    else:
        # Linear (unclamped) block index: for the clamped duplicate block this
        # puts row0 >= rows, so the whole block is masked out; for the (single)
        # boundary block only the overhang rows are dropped.
        row0 = (s * blocks_per_slice + b) * block_rows
        is_partial = row0 + block_rows > rows

        @pl.when(jnp.logical_not(is_partial))
        def _full():
            _accum(sq)

        @pl.when(is_partial)
        def _masked():
            row_ids = row0 + lax.broadcasted_iota(jnp.int32, sq.shape, 0)
            # Keep the select (NOT multiply-by-mask): out-of-bounds rows hold
            # unspecified data that must be discarded, not scaled.
            _accum(jnp.where(row_ids < rows, sq, 0.0))


def psnr_loss_pallas(x: jax.Array, y: jax.Array, max_val: float) -> jax.Array:
    assert x.shape == y.shape, (
        f"Expected tensors of equal shapes, but got {x.shape} and {y.shape}"
    )
    n = x.size

    # Keep native dtypes (no host upcast); the kernel upcasts per-block.
    xf = jnp.ravel(x)
    yf = jnp.ravel(y)

    lane_pad = (-n) % _LANES
    if lane_pad:
        # Rare fallback: a lane-dense 2D view needs n % 128 == 0. Zero padding
        # contributes 0 to the sum of squared diffs.
        xf = jnp.pad(xf, (0, lane_pad))
        yf = jnp.pad(yf, (0, lane_pad))
    rows = (n + lane_pad) // _LANES
    x2d = xf.reshape(rows, _LANES)
    y2d = yf.reshape(rows, _LANES)

    in_itemsize = max(x.dtype.itemsize, y.dtype.itemsize)
    min_itemsize = min(x.dtype.itemsize, y.dtype.itemsize)
    # Sublane packing multiple: 8 for 32-bit, 16 for 16-bit, 32 for 8-bit.
    sub_mult = max(_ACC_SUBLANES, 32 // min_itemsize)

    if n * in_itemsize <= _SMALL_INPUT_BYTES:
        # Tiny input: single-step, no grid, whole array is one VMEM block.
        partials = pl.pallas_call(
            _psnr_small_kernel,
            out_shape=jax.ShapeDtypeStruct((1, _LANES), jnp.float32),
        )(x2d, y2d)
    else:
        # Size the block in bytes, not rows (keeps each DMA step >= ~2 MiB for
        # every dtype), rounded to the sublane multiple.
        target_rows = max(sub_mult, _TARGET_BLOCK_BYTES // (_LANES * in_itemsize))
        rows_up = pl.cdiv(rows, sub_mult) * sub_mult
        block_rows = min(target_rows, rows_up)
        block_rows = max(sub_mult, (block_rows // sub_mult) * sub_mult)

        total_blocks = pl.cdiv(rows, block_rows)
        # Two independent slices so v7x's 2 TensorCores can each take one half;
        # harmless (sequential) on 1-TC v5e/v6e.
        n_slices = 2 if total_blocks >= 2 else 1
        blocks_per_slice = pl.cdiv(total_blocks, n_slices)

        needs_mask = (total_blocks * block_rows != rows) or (
            n_slices * blocks_per_slice != total_blocks)

        def in_map(s, b):
            # Clamp the (at most one) overhang grid point onto a valid block;
            # its contribution is fully masked out inside the kernel.
            return (jnp.minimum(s * blocks_per_slice + b, total_blocks - 1), 0)

        kernel = functools.partial(
            _psnr_partial_kernel,
            rows=rows,
            block_rows=block_rows,
            blocks_per_slice=blocks_per_slice,
            needs_mask=needs_mask,
        )

        partials = pl.pallas_call(
            kernel,
            out_shape=jax.ShapeDtypeStruct(
                (n_slices * _ACC_SUBLANES, _LANES), jnp.float32),
            grid_spec=pltpu.PrefetchScalarGridSpec(
                num_scalar_prefetch=0,
                grid=(n_slices, blocks_per_slice),
                in_specs=[
                    pl.BlockSpec((block_rows, _LANES), in_map),
                    pl.BlockSpec((block_rows, _LANES), in_map),
                ],
                out_specs=pl.BlockSpec((_ACC_SUBLANES, _LANES),
                                       lambda s, b: (s, 0)),
            ),
            compiler_params=pltpu.CompilerParams(
                dimension_semantics=("parallel", "arbitrary"),
                vmem_limit_bytes=_VMEM_LIMIT_BYTES,
            ),
        )(x2d, y2d)

    # Tiny finalize in plain JAX (a handful of scalar ops).
    sum_sq = jnp.sum(partials)
    mse = sum_sq / n
    # Matches the reference exactly: mse == 0 -> -inf (no eps), like torch code.
    return -10.0 * jnp.log10(jnp.float32(max_val) ** 2 / mse)


def _ref_loss(x, y, max_val):
    xf = x.astype(jnp.float32)
    yf = y.astype(jnp.float32)
    mse_ref = jnp.mean((xf - yf) ** 2)
    return -10.0 * jnp.log10(jnp.float32(max_val) ** 2 / mse_ref)


if __name__ == "__main__":
    key = jax.random.PRNGKey(0)
    keys = jax.random.split(key, 8)
    max_val = 1.0  # PSNRLoss(max_val=1.0)

    # 1) Primary small NCHW example (tiny -> single-step no-grid path).
    x1 = jax.random.uniform(keys[0], (2, 4, 16, 16), dtype=jnp.float32)
    y1 = jax.random.uniform(keys[1], (2, 4, 16, 16), dtype=jnp.float32)
    l1 = jax.block_until_ready(psnr_loss_pallas(x1, y1, max_val))
    r1 = _ref_loss(x1, y1, max_val)
    assert jnp.allclose(l1, r1, rtol=1e-5, atol=1e-5), (l1, r1)

    # 2) Mid-size f32 (general grid path, single block per slice).
    x2 = jax.random.uniform(keys[2], (2, 3, 160, 160), dtype=jnp.float32)
    y2 = jax.random.uniform(keys[3], (2, 3, 160, 160), dtype=jnp.float32)
    l2 = jax.block_until_ready(psnr_loss_pallas(x2, y2, max_val))
    r2 = _ref_loss(x2, y2, max_val)
    assert jnp.allclose(l2, r2, rtol=1e-4, atol=1e-5), (l2, r2)

    # 3) Larger f32 (multi-block, 2 slices, clamped duplicate masked block).
    x3 = jax.random.uniform(keys[4], (2, 3, 512, 512), dtype=jnp.float32)
    y3 = jax.random.uniform(keys[5], (2, 3, 512, 512), dtype=jnp.float32)
    l3 = jax.block_until_ready(psnr_loss_pallas(x3, y3, max_val))
    r3 = _ref_loss(x3, y3, max_val)
    assert jnp.allclose(l3, r3, rtol=1e-4, atol=1e-4), (l3, r3)

    # 4) Non-multiple-of-128 element count (lane-pad path).
    x4 = jax.random.uniform(keys[6], (5, 7, 33, 21), dtype=jnp.float32)
    y4 = jax.random.uniform(keys[7], (5, 7, 33, 21), dtype=jnp.float32)
    l4 = jax.block_until_ready(psnr_loss_pallas(x4, y4, max_val))
    r4 = _ref_loss(x4, y4, max_val)
    assert jnp.allclose(l4, r4, rtol=1e-5, atol=1e-5), (l4, r4)

    # 5) bf16 inputs (16-row sublane multiple, boundary-masked block).
    x5 = x3.astype(jnp.bfloat16)
    y5 = y3.astype(jnp.bfloat16)
    l5 = jax.block_until_ready(psnr_loss_pallas(x5, y5, max_val))
    r5 = _ref_loss(x5, y5, max_val)
    assert jnp.allclose(l5, r5, rtol=1e-4, atol=1e-4), (l5, r5)

    print("KERNEL_OK")
</pallas_src>

<mosaic_0001>
module attributes {stable_mosaic.version = 11 : i64} {
  func.func @_psnr_small_kernel(%arg0: memref<16x128xf32, #tpu.memory_space<vmem>>, %arg1: memref<16x128xf32, #tpu.memory_space<vmem>>, %arg2: memref<1x128xf32, #tpu.memory_space<vmem>>) attributes {dimension_semantics = [], scalar_prefetch = 0 : i64, scratch_operands = 0 : i64, tpu.core_type = #tpu.core_type<tc>} {
    %c0 = arith.constant 0 : index
    %c0_0 = arith.constant 0 : index
    %0 = vector.load %arg0[%c0, %c0_0] : memref<16x128xf32, #tpu.memory_space<vmem>>, vector<16x128xf32>
    %c0_1 = arith.constant 0 : index
    %c0_2 = arith.constant 0 : index
    %1 = vector.load %arg1[%c0_1, %c0_2] : memref<16x128xf32, #tpu.memory_space<vmem>>, vector<16x128xf32>
    %2 = arith.subf %0, %1 : vector<16x128xf32>
    %3 = arith.mulf %2, %2 : vector<16x128xf32>
    %cst = arith.constant dense<0.000000e+00> : vector<128xf32>
    %4 = vector.multi_reduction <add>, %3, %cst [0] : vector<16x128xf32> to vector<128xf32>
    %5 = vector.shape_cast %4 : vector<128xf32> to vector<1x128xf32>
    %c0_3 = arith.constant 0 : index
    %c0_4 = arith.constant 0 : index
    %6 = vector.load %arg2[%c0_3, %c0_4] : memref<1x128xf32, #tpu.memory_space<vmem>>, vector<1x128xf32>
    tpu.vector_store %arg2[%c0_3, %c0_4], %5 {strides = array<i32>} : memref<1x128xf32, #tpu.memory_space<vmem>>, vector<1x128xf32>,
    return
  }
}

</mosaic_0001>

<llo_original>
// kernel: tpu_custom_call.1
$region0: #{tpu_custom_call.1}
  #allocation0 [shape = 'u32[]', space=smem, size = 0x4, offset = 0x4, fixed_abs, tag = 'smem constant byte address 0x4 - core index']
  #allocation1 [shape = 'u32[144,128]{1,0:T(1,128)}', space=vmem, size = 0x12000, scoped, tag = 'internal scratch']
  %s0 = inlined_call_operand.hbm [shape: f32[16,128], index: 0, kind: input, shape index: {}]
  %s1 = inlined_call_operand.hbm [shape: f32[16,128], index: 1, kind: input, shape index: {}]
  %s2 = inlined_call_operand.hbm [shape: f32[1,128], index: 2, kind: output, shape index: {}]
  %s3 = sld [smem:[#allocation0]]
  $region26: #{tpu_custom_call.1} parent=0
    _
  %s5 = ssub.s32 1, %s3
  %s6 = scalar_select 0, %s5, %s3
  $region1: #{tpu_custom_call.1} parent=0
    #allocation2 [shape = 'u8[8192]{0}', space=vmem, size = 0x2000, scoped, tag = 'input window, operand 0, single buffered']
    #allocation3 [shape = 's32[1]{0}', space=sflag, size = 0x4, scoped, tag = 'scoped memory for tpu_custom_call.1']
    #allocation4 [shape = 's32[1]{0}', space=sflag, size = 0x4, scoped, tag = 'scoped memory for tpu_custom_call.1']
    #allocation5 [shape = 'u8[8192]{0}', space=vmem, size = 0x2000, scoped, tag = 'input window, operand 1, single buffered']
    #allocation6 [shape = 's32[1]{0}', space=sflag, size = 0x4, scoped, tag = 'scoped memory for tpu_custom_call.1']
    #allocation7 [shape = 'u8[512]{0}', space=vmem, size = 0x400, scoped, tag = 'output window, operand 0, single buffered']
    %7 = vsyncpa [#allocation3], 0
    %8 = vsyncpa [#allocation6], 0
    %9 = vsyncpa [#allocation4], 0
    // Predicated region
    $region2: #{tpu_custom_call.1} parent=1 // pred_check
      _
    $region3: #{tpu_custom_call.1} parent=1 // pred_check_branch
      %11 = sbr.rel (0) target = $region5
    $region4: #{tpu_custom_call.1} parent=1 // pred_region
      %s13 = ssub.s32 256, 256
      %14 = vsyncadd [#allocation3], %s13
      %s15 = sshll.u32 [#allocation2], 4
      %s16 = int_to_ptr.vmem [resolvable:$true] %s15
      %21 = dma.hbm_to_vmem [thread:$0]  %s0, 256, %s16, [#allocation3], 128, 128, 8
    $region5: #{tpu_custom_call.1} parent=1 // pred_fallthru
      _
    // Predicated region
    $region6: #{tpu_custom_call.1} parent=1 // pred_check
      _
    $region7: #{tpu_custom_call.1} parent=1 // pred_check_branch
      %23 = sbr.rel (0) target = $region9
    $region8: #{tpu_custom_call.1} parent=1 // pred_region
      %s25 = ssub.s32 256, 256
      %26 = vsyncadd [#allocation6], %s25
      %s27 = sshll.u32 [#allocation5], 4
      %s28 = int_to_ptr.vmem [resolvable:$true] %s27
      %33 = dma.hbm_to_vmem [thread:$0]  %s1, 256, %s28, [#allocation6], 128, 128, 8
    $region9: #{tpu_custom_call.1} parent=1 // pred_fallthru
      _
    // Predicated region
    $region10: #{tpu_custom_call.1} parent=1 // pred_check
      _
    $region11: #{tpu_custom_call.1} parent=1 // pred_check_branch
      %35 = sbr.rel (0) target = $region13
    $region12: #{tpu_custom_call.1} parent=1 // pred_region
      %36 = dma.done [#allocation3], 256
    $region13: #{tpu_custom_call.1} parent=1 // pred_fallthru
      _
    // Predicated region
    $region14: #{tpu_custom_call.1} parent=1 // pred_check
      _
    $region15: #{tpu_custom_call.1} parent=1 // pred_check_branch
      %38 = sbr.rel (0) target = $region17
    $region16: #{tpu_custom_call.1} parent=1 // pred_region
      %39 = dma.done [#allocation6], 256
    $region17: #{tpu_custom_call.1} parent=1 // pred_fallthru
      _
    %v40 = vld [vmem:[#allocation2] sm:$0xff]
    %v41 = vld [vmem:[#allocation2 + $0x8] sm:$0xff]
    %v42 = vld [vmem:[#allocation5] sm:$0xff]
    %v43 = vld [vmem:[#allocation5 + $0x8] sm:$0xff]
    %v44 = vsub.f32 %v40, %v42
    %v45 = vsub.f32 %v41, %v43
    %v46 = vmul.f32 %v44, %v44
    %v47 = vmul.f32 %v45, %v45
    %v48 = vadd.f32 %v46, %v47
    %v49 = vrot.slane %v48, 4
    %v50 = vadd.f32 %v48, %v49
    %v51 = vrot.slane %v50, 2
    %v52 = vadd.f32 %v50, %v51
    %v53 = vrot.slane %v52, 1
    %v54 = vadd.f32 %v52, %v53
    %55 = vst [vmem:[#allocation7] sm:$0x1] %v54
    // Predicated region
    $region18: #{tpu_custom_call.1} parent=1 // pred_check
      _
    $region19: #{tpu_custom_call.1} parent=1 // pred_check_branch
      %57 = sbr.rel (0) target = $region21
    $region20: #{tpu_custom_call.1} parent=1 // pred_region
      %s59 = ssub.s32 16, 16
      %60 = vsyncadd [#allocation4], %s59
      %s62 = sshll.u32 [#allocation7], 4
      %s63 = int_to_ptr.vmem [resolvable:$true] %s62
      %65 = dma.vmem_to_hbm [thread:$0]  %s63, 16, %s2, [#allocation4]
    $region21: #{tpu_custom_call.1} parent=1 // pred_fallthru
      _
    // Predicated region
    $region22: #{tpu_custom_call.1} parent=1 // pred_check
      _
    $region23: #{tpu_custom_call.1} parent=1 // pred_check_branch
      %67 = sbr.rel (0) target = $region25
    $region24: #{tpu_custom_call.1} parent=1 // pred_region
      %68 = dma.done [#allocation4], 16
    $region25: #{tpu_custom_call.1} parent=1 // pred_fallthru
      _
    %69 = vsyncpa [#allocation3], 1
    %70 = vsyncpa [#allocation6], 1
    %71 = vsyncpa [#allocation4], 1

</llo_original>
